<compile_context>
chip_gen: v7x
topology: tpu7x:2x2x1
jax: 0.10.0
libtpu: 0.0.40
codegen_flags: <defaults>
</compile_context>

<pallas_src>
import jax
import jax.numpy as jnp
from jax.experimental import pallas as pl
from jax.experimental.pallas import tpu as pltpu


def temporal_attention_kernel(whb_ref, feats_ref, uT_ref, wcol_ref,
                              attn_ref, weights_ref):
    # whb_ref    : (Bb, 1, Bn)  f32  precomputed  hidden @ W.T + b
    # feats_ref  : (Bb, T, F)   compute dtype (f32 / bf16) temporal features
    # uT_ref     : (F, Bn)      compute dtype  U.weight transposed (grid-invariant)
    # wcol_ref   : (Bn, 1)      f32  w.weight as a column vector (grid-invariant)
    # attn_ref   : (Bb, F)      attended features (dense 2-D slab)
    # weights_ref: (Bb, T, 1)   f32  softmax attention weights
    Bb, T, F = feats_ref.shape
    Bn = uT_ref.shape[1]

    feats = feats_ref[...]                                     # (Bb, T, F)
    # Layout no-op flatten (T is a multiple of the sublane packing of the
    # compute dtype): present M = Bb*T rows to the MXU in one matmul.
    feats2 = feats.reshape(Bb * T, F)

    Uv = jnp.dot(feats2, uT_ref[...],
                 preferred_element_type=jnp.float32)           # (Bb*T, Bn) MXU

    # Broadcast the per-batch hidden projection over the T sublanes (f32).
    act = jnp.tanh(Uv.reshape(Bb, T, Bn) + whb_ref[...])       # (Bb, T, Bn)

    # Energies via the MXU.  The N=1 matmul is cheap while the kernel stays
    # HBM-bound; swap for a VPU mul + XLU lane-reduce if it becomes MXU-bound.
    energies = jnp.dot(act.reshape(Bb * T, Bn), wcol_ref[...],
                       preferred_element_type=jnp.float32)     # (Bb*T, 1)
    e = energies.reshape(Bb, T, 1)

    # Softmax over the temporal axis (dim=1 in the PyTorch module), in f32.
    m = jnp.max(e, axis=1, keepdims=True)                      # (Bb, 1, 1)
    p = jnp.exp(e - m)                                         # (Bb, T, 1)
    denom = jnp.sum(p, axis=1, keepdims=True)                  # (Bb, 1, 1)
    # approx=False keeps tight parity with the reference; approx=True is a
    # drop-in if ~1e-4 tolerance on the weights is acceptable.
    weights = p * pl.reciprocal(denom, approx=False)           # (Bb, T, 1)

    weights_ref[...] = weights.astype(weights_ref.dtype)

    # Weighted temporal sum in f32; the result is a sublane/lane-dense (Bb, F)
    # block so the writeback is an unmasked vst stream.
    attn = jnp.sum(feats.astype(jnp.float32) * weights, axis=1)  # (Bb, F)
    attn_ref[...] = attn.astype(attn_ref.dtype)


def _round_up(x, m):
    return (x + m - 1) // m * m


def _choose_batch_block(B, T, F, Bn, compute_itemsize, out_itemsize,
                        vmem_budget_bytes):
    """Largest batch tile whose per-step VMEM footprint (double-buffered feats,
    whb and outputs, f32 temporaries, plus the grid-invariant weight operands)
    fits the budget, rounded down to the 8-row sublane tile and capped at
    ceil(B/2) so there are >= 2 grid steps for v7x's two TensorCores."""
    SUB = 8
    fixed = 2 * (F * Bn * compute_itemsize + Bn * 4)           # uT + wcol
    per_row = (2 * T * F * compute_itemsize                    # feats (dbl-buffered)
               + 2 * Bn * 4                                    # whb
               + 2 * (F * out_itemsize + T * 4)                # attn + weights out
               + 2 * T * Bn * 4)                               # Uv / act temporaries
    bb = max(vmem_budget_bytes - fixed, SUB * per_row) // per_row
    bb = max((bb // SUB) * SUB, SUB)
    if B > SUB:
        bb = min(bb, _round_up((B + 1) // 2, SUB))             # megacore split
    if bb >= B:
        bb = B                      # full-extent block (any B, incl. B < 8)
    return bb


def temporal_attention(hidden, feats, W, U, b, w, *, compute_dtype=None,
                       vmem_budget_bytes=48 * 1024 * 1024):
    """hidden: (B, H); feats: (B, T, F).
    W: (Bn, H), U: (Bn, F), b: (Bn,), w: (1, Bn)  (PyTorch Linear weight layout).

    compute_dtype: dtype for the streamed feats and the U weights (the
    HBM-dominant operands).  float32 (default) gives 1e-5 parity with the
    reference; bfloat16 halves the dominant HBM stream and uses the native
    bf16 MXU path (accumulation / tanh / softmax / returned weights stay f32).

    Returns (attn_feats (B, F) in feats.dtype, weights (B, T, 1) in f32)."""
    B, H = hidden.shape
    _, T, F = feats.shape
    Bn = W.shape[0]

    out_dtype = feats.dtype
    compute_dtype = jnp.dtype(compute_dtype if compute_dtype is not None
                              else feats.dtype)
    compute_itemsize = compute_dtype.itemsize

    # The in-kernel (Bb, T, F) -> (Bb*T, F) flatten is a pure layout no-op only
    # when T is a multiple of the sublane packing of the compute dtype
    # (8 rows for f32, 16 for bf16).
    # TODO(synk): pad T (with -inf-masked energies) to support ragged T.
    sub_t = 8 * (4 // compute_itemsize)
    assert T % sub_t == 0, (
        f"temporal axis ({T}) must be a multiple of {sub_t} for "
        f"{compute_dtype} feats")

    Bb = _choose_batch_block(B, T, F, Bn, compute_itemsize,
                             jnp.dtype(out_dtype).itemsize, vmem_budget_bytes)
    grid = (pl.cdiv(B, Bb),)
    # NOTE: when B % Bb != 0 the padded rows of the last block compute on
    # undefined data; rows are independent and out-of-range writes are
    # dropped, so the valid rows are unaffected.

    # Hoist the small hidden projection (+ bias) out of the kernel so only the
    # feats stream + U weights ride through the pipeline; shape (B, 1, Bn) so
    # it broadcasts over T inside the kernel without any relayout.
    whb = (hidden.astype(jnp.float32) @ W.T.astype(jnp.float32)
           + b.astype(jnp.float32)).reshape(B, 1, Bn)
    feats_c = feats.astype(compute_dtype)
    uT = U.T.astype(compute_dtype)                  # (F, Bn)
    wcol = w.reshape(Bn, 1).astype(jnp.float32)     # (Bn, 1)

    out_shapes = (
        jax.ShapeDtypeStruct((B, F), out_dtype),        # attn (dense 2-D slab)
        jax.ShapeDtypeStruct((B, T, 1), jnp.float32),   # softmax weights
    )
    grid_spec = pltpu.PrefetchScalarGridSpec(
        num_scalar_prefetch=0,
        grid=grid,
        in_specs=[
            pl.BlockSpec((Bb, 1, Bn), lambda i: (i, 0, 0)),   # whb
            pl.BlockSpec((Bb, T, F), lambda i: (i, 0, 0)),    # feats
            pl.BlockSpec((F, Bn), lambda i: (0, 0)),          # U^T (grid-invariant)
            pl.BlockSpec((Bn, 1), lambda i: (0, 0)),          # w   (grid-invariant)
        ],
        out_specs=[
            pl.BlockSpec((Bb, F), lambda i: (i, 0)),          # dense attn slab
            pl.BlockSpec((Bb, T, 1), lambda i: (i, 0, 0)),
        ],
    )
    # Advisory cost estimate so XLA schedules around the custom call.
    cost = pl.CostEstimate(
        flops=2 * B * T * F * Bn + 2 * B * T * Bn + 2 * B * T * F,
        transcendentals=B * T * (Bn + 1),
        bytes_accessed=(feats_c.size * compute_itemsize
                        + whb.size * 4
                        + uT.size * compute_itemsize + wcol.size * 4
                        + B * F * jnp.dtype(out_dtype).itemsize
                        + B * T * 4),
    )
    # TODO(synk): sweep pipeline_mode (pl.Buffered(1) on grid-invariant uT/wcol,
    # pl.Buffered(3) on feats) once tiles are profiled on v7x.
    attn, weights = pl.pallas_call(
        temporal_attention_kernel,
        out_shape=out_shapes,
        grid_spec=grid_spec,
        compiler_params=pltpu.CompilerParams(
            dimension_semantics=("parallel",),
            # Budget is sized for v7x's 64 MiB VMEM; keep headroom and never
            # exceed ~56 MiB (raise vmem_budget_bytes on v5e/v6e if desired).
            vmem_limit_bytes=min(vmem_budget_bytes + (8 << 20), 56 << 20)),
        cost_estimate=cost,
    )(whb, feats_c, uT, wcol)
    return attn, weights


def temporal_attention_ref(hidden, feats, W, U, b, w):
    Wh = hidden @ W.T                                   # (B, Bn)
    Uv = jnp.einsum("btf,nf->btn", feats, U)            # (B, T, Bn)
    act = jnp.tanh(Wh[:, None, :] + Uv + b)             # (B, T, Bn)
    energies = jnp.einsum("btn,on->bto", act, w)        # (B, T, 1)
    weights = jax.nn.softmax(energies, axis=1)
    attn = jnp.sum(feats * weights, axis=1)             # (B, F)
    return attn, weights


if __name__ == "__main__":
    B, T = 4, 16
    hidden_size, feat_size, bottleneck_size = 32, 64, 32

    key = jax.random.PRNGKey(0)
    k1, k2, k3, k4, k5 = jax.random.split(key, 5)

    hidden = jax.random.normal(k1, (B, hidden_size), dtype=jnp.float32)
    feats = jax.random.normal(k2, (B, T, feat_size), dtype=jnp.float32)

    # Deterministic parameter init (shapes follow nn.Linear weight layout).
    W = jax.random.normal(k3, (bottleneck_size, hidden_size),
                          dtype=jnp.float32) * 0.1
    U = jax.random.normal(k4, (bottleneck_size, feat_size),
                          dtype=jnp.float32) * 0.1
    b = jnp.ones((bottleneck_size,), dtype=jnp.float32)   # torch.ones init
    w = jax.random.normal(k5, (1, bottleneck_size), dtype=jnp.float32) * 0.1

    # ---- f32 path: tight parity with the reference -------------------------
    attn, weights = temporal_attention(hidden, feats, W, U, b, w)
    jax.block_until_ready((attn, weights))

    attn_r, weights_r = temporal_attention_ref(hidden, feats, W, U, b, w)
    assert attn.shape == (B, feat_size) and weights.shape == (B, T, 1)
    assert jnp.allclose(attn, attn_r, atol=1e-5, rtol=1e-5)
    assert jnp.allclose(weights, weights_r, atol=1e-5, rtol=1e-5)

    # ---- bf16 feats path: halves the dominant HBM stream -------------------
    attn_b, weights_b = temporal_attention(hidden, feats, W, U, b, w,
                                           compute_dtype=jnp.bfloat16)
    jax.block_until_ready((attn_b, weights_b))
    # Compare against the reference evaluated on the same bf16-quantized
    # operands (bf16 MXU accumulates in f32, so only quantization differs).
    feats_q = feats.astype(jnp.bfloat16).astype(jnp.float32)
    U_q = U.astype(jnp.bfloat16).astype(jnp.float32)
    attn_qr, weights_qr = temporal_attention_ref(hidden, feats_q, W, U_q, b, w)
    assert jnp.allclose(attn_b, attn_qr, atol=1e-3, rtol=1e-3)
    assert jnp.allclose(weights_b, weights_qr, atol=1e-3, rtol=1e-3)

    print("KERNEL_OK")
</pallas_src>

<mosaic_0001>
module attributes {stable_mosaic.version = 11 : i64} {
  func.func @temporal_attention_kernel(%arg0: i32, %arg1: memref<4x1x32xf32, #tpu.memory_space<vmem>>, %arg2: memref<4x16x64xf32, #tpu.memory_space<vmem>>, %arg3: memref<64x32xf32, #tpu.memory_space<vmem>>, %arg4: memref<32x1xf32, #tpu.memory_space<vmem>>, %arg5: memref<4x64xf32, #tpu.memory_space<vmem>>, %arg6: memref<4x16x1xf32, #tpu.memory_space<vmem>>) attributes {dimension_semantics = [#tpu.dimension_semantics<parallel>], iteration_bounds = array<i64: 1>, scalar_prefetch = 0 : i64, scratch_operands = 0 : i64, tpu.core_type = #tpu.core_type<tc>, window_params = [{transform_indices = @transform_0, window_bounds = array<i64: 4, 1, 32>}, {transform_indices = @transform_1, window_bounds = array<i64: 4, 16, 64>}, {pipeline_mode = #tpu.pipeline_mode<synchronous>, transform_indices = @transform_2, window_bounds = array<i64: 64, 32>}, {pipeline_mode = #tpu.pipeline_mode<synchronous>, transform_indices = @transform_3, window_bounds = array<i64: 32, 1>}, {transform_indices = @transform_4, window_bounds = array<i64: 4, 64>}, {transform_indices = @transform_5, window_bounds = array<i64: 4, 16, 1>}]} {
    %c0 = arith.constant 0 : index
    %c0_0 = arith.constant 0 : index
    %c0_1 = arith.constant 0 : index
    %0 = vector.load %arg2[%c0, %c0_0, %c0_1] : memref<4x16x64xf32, #tpu.memory_space<vmem>>, vector<4x16x64xf32>
    %1 = vector.shape_cast %0 : vector<4x16x64xf32> to vector<64x64xf32>
    %c0_2 = arith.constant 0 : index
    %c0_3 = arith.constant 0 : index
    %2 = vector.load %arg3[%c0_2, %c0_3] : memref<64x32xf32, #tpu.memory_space<vmem>>, vector<64x32xf32>
    %cst = arith.constant dense<0.000000e+00> : vector<64x32xf32>
    %3 = tpu.matmul %1, %2, %cst {dimension_numbers = #tpu.dot_dimension_numbers<[1], [0], [0], [1], [0, 0, 1, 1], [], []>} : vector<64x64xf32>, vector<64x32xf32>, vector<64x32xf32> -> vector<64x32xf32>
    %4 = vector.shape_cast %3 : vector<64x32xf32> to vector<4x16x32xf32>
    %c0_4 = arith.constant 0 : index
    %c0_5 = arith.constant 0 : index
    %c0_6 = arith.constant 0 : index
    %5 = vector.load %arg1[%c0_4, %c0_5, %c0_6] : memref<4x1x32xf32, #tpu.memory_space<vmem>>, vector<4x1x32xf32>
    %6 = vector.broadcast %5 : vector<4x1x32xf32> to vector<4x16x32xf32>
    %7 = arith.addf %4, %6 : vector<4x16x32xf32>
    %8 = math.tanh %7 : vector<4x16x32xf32>
    %9 = vector.shape_cast %8 : vector<4x16x32xf32> to vector<64x32xf32>
    %c0_7 = arith.constant 0 : index
    %c0_8 = arith.constant 0 : index
    %10 = vector.load %arg4[%c0_7, %c0_8] : memref<32x1xf32, #tpu.memory_space<vmem>>, vector<32x1xf32>
    %cst_9 = arith.constant dense<0.000000e+00> : vector<64x1xf32>
    %11 = tpu.matmul %9, %10, %cst_9 {dimension_numbers = #tpu.dot_dimension_numbers<[1], [0], [0], [1], [0, 0, 1, 1], [], []>} : vector<64x32xf32>, vector<32x1xf32>, vector<64x1xf32> -> vector<64x1xf32>
    %12 = vector.shape_cast %11 : vector<64x1xf32> to vector<4x16x1xf32>
    %cst_10 = arith.constant dense<0xFF800000> : vector<4x1xf32>
    %13 = vector.multi_reduction <maximumf>, %12, %cst_10 [1] : vector<4x16x1xf32> to vector<4x1xf32>
    %14 = vector.shape_cast %13 : vector<4x1xf32> to vector<4x1x1xf32>
    %15 = vector.broadcast %14 : vector<4x1x1xf32> to vector<4x16x1xf32>
    %16 = arith.subf %12, %15 : vector<4x16x1xf32>
    %17 = math.exp %16 : vector<4x16x1xf32>
    %cst_11 = arith.constant dense<0.000000e+00> : vector<4x1xf32>
    %18 = vector.multi_reduction <add>, %17, %cst_11 [1] : vector<4x16x1xf32> to vector<4x1xf32>
    %19 = vector.shape_cast %18 : vector<4x1xf32> to vector<4x1x1xf32>
    %20 = tpu.reciprocal %19 : vector<4x1x1xf32> -> vector<4x1x1xf32>
    %21 = vector.broadcast %20 : vector<4x1x1xf32> to vector<4x16x1xf32>
    %22 = arith.mulf %17, %21 : vector<4x16x1xf32>
    %c0_12 = arith.constant 0 : index
    %c0_13 = arith.constant 0 : index
    %c0_14 = arith.constant 0 : index
    %23 = vector.load %arg6[%c0_12, %c0_13, %c0_14] : memref<4x16x1xf32, #tpu.memory_space<vmem>>, vector<4x16x1xf32>
    tpu.vector_store %arg6[%c0_12, %c0_13, %c0_14], %22 {strides = array<i32>} : memref<4x16x1xf32, #tpu.memory_space<vmem>>, vector<4x16x1xf32>,
    %24 = vector.broadcast %22 : vector<4x16x1xf32> to vector<4x16x64xf32>
    %25 = arith.mulf %0, %24 : vector<4x16x64xf32>
    %cst_15 = arith.constant dense<0.000000e+00> : vector<4x64xf32>
    %26 = vector.multi_reduction <add>, %25, %cst_15 [1] : vector<4x16x64xf32> to vector<4x64xf32>
    %c0_16 = arith.constant 0 : index
    %c0_17 = arith.constant 0 : index
    %27 = vector.load %arg5[%c0_16, %c0_17] : memref<4x64xf32, #tpu.memory_space<vmem>>, vector<4x64xf32>
    tpu.vector_store %arg5[%c0_16, %c0_17], %26 {strides = array<i32>} : memref<4x64xf32, #tpu.memory_space<vmem>>, vector<4x64xf32>,
    return
  }
  func.func @transform_0(%arg0: i32) -> (i32, i32, i32) {
    %c0_i32 = arith.constant 0 : i32
    %c0_i32_0 = arith.constant 0 : i32
    %c0_i32_1 = arith.constant 0 : i32
    return %arg0, %c0_i32, %c0_i32_0 : i32, i32, i32
  }
  func.func @transform_1(%arg0: i32) -> (i32, i32, i32) {
    %c0_i32 = arith.constant 0 : i32
    %c0_i32_0 = arith.constant 0 : i32
    %c0_i32_1 = arith.constant 0 : i32
    return %arg0, %c0_i32, %c0_i32_0 : i32, i32, i32
  }
  func.func @transform_2(%arg0: i32) -> (i32, i32) {
    %c0_i32 = arith.constant 0 : i32
    %c0_i32_0 = arith.constant 0 : i32
    %c0_i32_1 = arith.constant 0 : i32
    return %c0_i32, %c0_i32_0 : i32, i32
  }
  func.func @transform_3(%arg0: i32) -> (i32, i32) {
    %c0_i32 = arith.constant 0 : i32
    %c0_i32_0 = arith.constant 0 : i32
    %c0_i32_1 = arith.constant 0 : i32
    return %c0_i32, %c0_i32_0 : i32, i32
  }
  func.func @transform_4(%arg0: i32) -> (i32, i32) {
    %c0_i32 = arith.constant 0 : i32
    %c0_i32_0 = arith.constant 0 : i32
    return %arg0, %c0_i32 : i32, i32
  }
  func.func @transform_5(%arg0: i32) -> (i32, i32, i32) {
    %c0_i32 = arith.constant 0 : i32
    %c0_i32_0 = arith.constant 0 : i32
    %c0_i32_1 = arith.constant 0 : i32
    return %arg0, %c0_i32, %c0_i32_0 : i32, i32, i32
  }
}

</mosaic_0001>

<llo_original>
// kernel: tpu_custom_call.1
$region0: #{tpu_custom_call.1}
  #allocation0 [shape = 'u32[]', space=smem, size = 0x4, offset = 0x4, fixed_abs, tag = 'smem constant byte address 0x4 - core index']
  #allocation1 [shape = 'u32[144,128]{1,0:T(1,128)}', space=vmem, size = 0x12000, scoped, tag = 'internal scratch']
  %s0 = inlined_call_operand.vmem [shape: f32[4,1,32], index: 0, kind: input, shape index: {}]
  %s1 = inlined_call_operand.vmem [shape: f32[4,16,64], index: 1, kind: input, shape index: {}]
  %s2 = inlined_call_operand.vmem [shape: f32[64,32], index: 2, kind: input, shape index: {}]
  %s3 = inlined_call_operand.vmem [shape: f32[32,1], index: 3, kind: input, shape index: {}]
  %s4 = inlined_call_operand.hbm [shape: f32[4,64], index: 4, kind: output, shape index: {0}]
  %s5 = inlined_call_operand.vmem [shape: f32[4,16,1], index: 5, kind: output, shape index: {1}]
  %6 = xla_tuple %s4, %s5
  %s7 = sld [smem:[#allocation0]]
  $region34: #{tpu_custom_call.1} parent=0
    _
  %s9 = ssub.s32 1, %s7
  %s10 = scalar_select 0, %s9, %s7
  $region1: #{tpu_custom_call.1} parent=0
    #allocation2 [shape = 'u8[2048]{0}', space=vmem, size = 0x800, scoped, tag = 'output window, operand 0, single buffered']
    #allocation3 [shape = 's32[1]{0}', space=sflag, size = 0x4, scoped, tag = 'scoped memory for tpu_custom_call.1']
    %11 = vsyncpa [#allocation3], 0
    // Predicated region
    $region2: #{tpu_custom_call.1} parent=1 // pred_check
      _
    $region3: #{tpu_custom_call.1} parent=1 // pred_check_branch
      %13 = sbr.rel (0) target = $region5
    $region4: #{tpu_custom_call.1} parent=1 // pred_region
      _
    $region5: #{tpu_custom_call.1} parent=1 // pred_fallthru
      _
    // Predicated region
    $region6: #{tpu_custom_call.1} parent=1 // pred_check
      _
    $region7: #{tpu_custom_call.1} parent=1 // pred_check_branch
      %15 = sbr.rel (0) target = $region9
    $region8: #{tpu_custom_call.1} parent=1 // pred_region
      _
    $region9: #{tpu_custom_call.1} parent=1 // pred_fallthru
      _
    // Predicated region
    $region10: #{tpu_custom_call.1} parent=1 // pred_check
      _
    $region11: #{tpu_custom_call.1} parent=1 // pred_check_branch
      %17 = sbr.rel (0) target = $region13
    $region12: #{tpu_custom_call.1} parent=1 // pred_region
      _
    $region13: #{tpu_custom_call.1} parent=1 // pred_fallthru
      _
    // Predicated region
    $region14: #{tpu_custom_call.1} parent=1 // pred_check
      _
    $region15: #{tpu_custom_call.1} parent=1 // pred_check_branch
      %19 = sbr.rel (0) target = $region17
    $region16: #{tpu_custom_call.1} parent=1 // pred_region
      _
    $region17: #{tpu_custom_call.1} parent=1 // pred_fallthru
      _
    %v20 = vld [vmem:[%s1] sm:$0xff]
    %v21 = vld [vmem:[%s1 + $0x8] sm:$0xff]
    %v22 = vld [vmem:[%s1 + $0x10] sm:$0xff]
    %v23 = vld [vmem:[%s1 + $0x18] sm:$0xff]
    %v24 = vld [vmem:[%s1 + $0x20] sm:$0xff]
    %v25 = vld [vmem:[%s1 + $0x28] sm:$0xff]
    %v26 = vld [vmem:[%s1 + $0x30] sm:$0xff]
    %v27 = vld [vmem:[%s1 + $0x38] sm:$0xff]
    %v28 = vld [vmem:[%s2] sm:$0xff]
    %v29 = vld [vmem:[%s2 + $0x8] sm:$0xff]
    %v30 = vld [vmem:[%s2 + $0x10] sm:$0xff]
    %v31 = vld [vmem:[%s2 + $0x18] sm:$0xff]
    %v32 = vld [vmem:[%s2 + $0x20] sm:$0xff]
    %v33 = vld [vmem:[%s2 + $0x28] sm:$0xff]
    %v34 = vld [vmem:[%s2 + $0x30] sm:$0xff]
    %v35 = vld [vmem:[%s2 + $0x38] sm:$0xff]
    %vm36 = vcmask 523264
    %v38 = vsel %vm36, %v20, 0
    %v41 = vsel %vm36, %v21, 0
    %v44 = vsel %vm36, %v22, 0
    %v47 = vsel %vm36, %v23, 0
    %v50 = vsel %vm36, %v24, 0
    %v53 = vsel %vm36, %v25, 0
    %v56 = vsel %vm36, %v26, 0
    %v59 = vsel %vm36, %v27, 0
    %61 = vmatprep.subr.mxu0 0.0
    %62 = vmatpush1.msra.mxu0 %v28
    %63 = vmatprep.subr.mxu0 0.0
    %64 = vmatpush1.msra.mxu0 %v29
    %65 = vmatprep.subr.mxu0 0.0
    %66 = vmatpush1.msra.mxu0 %v30
    %67 = vmatprep.subr.mxu0 0.0
    %68 = vmatpush1.msra.mxu0 %v31
    %69 = vmatprep.subr.mxu0 0.0
    %70 = vmatpush1.msra.mxu0 %v32
    %71 = vmatprep.subr.mxu0 0.0
    %72 = vmatpush1.msra.mxu0 %v33
    %73 = vmatprep.subr.mxu0 0.0
    %74 = vmatpush1.msra.mxu0 %v34
    %75 = vmatprep.subr.mxu0 0.0
    %76 = vmatpush1.msra.mxu0 %v35
    %77 = vmatprep.subr.mxu0 0.0
    %78 = vmatpush1.msra.mxu0 0.0
    %79 = vmatprep.subr.mxu0 0.0
    %80 = vmatpush1.msra.mxu0 0.0
    %81 = vmatprep.subr.mxu0 0.0
    %82 = vmatpush1.msra.mxu0 0.0
    %83 = vmatprep.subr.mxu0 0.0
    %84 = vmatpush1.msra.mxu0 0.0
    %85 = vmatprep.subr.mxu0 0.0
    %86 = vmatpush1.msra.mxu0 0.0
    %87 = vmatprep.subr.mxu0 0.0
    %88 = vmatpush1.msra.mxu0 0.0
    %89 = vmatprep.subr.mxu0 0.0
    %90 = vmatpush1.msra.mxu0 0.0
    %91 = vmatprep.subr.mxu0 0.0
    %92 = vmatpush1.msra.mxu0 0.0
    %93 = vmatprep.subr.mxu0 0.0
    %94 = vmatpush1.msra.mxu0 0.0
    %95 = vmatprep.subr.mxu0 0.0
    %96 = vmatpush1.msra.mxu0 0.0
    %97 = vmatprep.subr.mxu0 0.0
    %98 = vmatpush1.msra.mxu0 0.0
    %99 = vmatprep.subr.mxu0 0.0
    %100 = vmatpush1.msra.mxu0 0.0
    %101 = vmatprep.subr.mxu0 0.0
    %102 = vmatpush1.msra.mxu0 0.0
    %103 = vmatprep.subr.mxu0 0.0
    %104 = vmatpush1.msra.mxu0 0.0
    %105 = vmatprep.subr.mxu0 0.0
    %106 = vmatpush1.msra.mxu0 0.0
    %107 = vmatprep.subr.mxu0 0.0
    %108 = vmatpush1.msra.mxu0 0.0
    %109 = vmatprep.subr.mxu0 0.0
    %110 = vmatpush1.msra.mxu0 0.0
    %111 = vmatprep.subr.mxu0 0.0
    %112 = vmatpush1.msra.mxu0 0.0
    %113 = vmatprep.subr.mxu0 0.0
    %114 = vmatpush1.msra.mxu0 0.0
    %115 = vmatprep.subr.mxu0 0.0
    %116 = vmatpush1.msra.mxu0 0.0
    %117 = vmatprep.subr.mxu0 0.0
    %118 = vmatpush1.msra.mxu0 0.0
    %119 = vmatprep.subr.mxu0 0.0
    %120 = vmatpush1.msra.mxu0 0.0
    %121 = vmatprep.subr.mxu0 0.0
    %122 = vmatpush1.msra.mxu0 0.0
    %123 = vmatprep.subr.mxu0 0.0
    %124 = vmatpush1.msra.mxu0 0.0
    %125 = vmatprep.mubr.f32.mxu0 0.0
    %126 = vmatmul.mubr.f32.gmra.mrb[0].mxu0 %v38
    %v127 = vpop.f32.mrb[0].mxu0
    %v128 = vadd.f32 0.0, %v127
    %v129 = vpop.f32.mrb[0].mxu0
    %130 = vmatprep.mubr.f32.mxu0 0.0
    %131 = vmatmul.mubr.f32.gmra.mrb[0].mxu0 %v41
    %v132 = vpop.f32.mrb[0].mxu0
    %v133 = vadd.f32 0.0, %v132
    %v134 = vpop.f32.mrb[0].mxu0
    %135 = vmatprep.mubr.f32.mxu0 0.0
    %136 = vmatmul.mubr.f32.gmra.mrb[0].mxu0 %v44
    %v137 = vpop.f32.mrb[0].mxu0
    %v138 = vadd.f32 0.0, %v137
    %v139 = vpop.f32.mrb[0].mxu0
    %140 = vmatprep.mubr.f32.mxu0 0.0
    %141 = vmatmul.mubr.f32.gmra.mrb[0].mxu0 %v47
    %v142 = vpop.f32.mrb[0].mxu0
    %v143 = vadd.f32 0.0, %v142
    %v144 = vpop.f32.mrb[0].mxu0
    %145 = vmatprep.mubr.f32.mxu0 0.0
    %146 = vmatmul.mubr.f32.gmra.mrb[0].mxu0 %v50
    %v147 = vpop.f32.mrb[0].mxu0
    %v148 = vadd.f32 0.0, %v147
    %v149 = vpop.f32.mrb[0].mxu0
    %150 = vmatprep.mubr.f32.mxu0 0.0
    %151 = vmatmul.mubr.f32.gmra.mrb[0].mxu0 %v53
    %v152 = vpop.f32.mrb[0].mxu0
    %v153 = vadd.f32 0.0, %v152
    %v154 = vpop.f32.mrb[0].mxu0
    %155 = vmatprep.mubr.f32.mxu0 0.0
    %156 = vmatmul.mubr.f32.gmra.mrb[0].mxu0 %v56
    %v157 = vpop.f32.mrb[0].mxu0
    %v158 = vadd.f32 0.0, %v157
    %v159 = vpop.f32.mrb[0].mxu0
    %160 = vmatprep.mubr.f32.mxu0 0.0
    %161 = vmatmul.mubr.f32.gmra.mrb[0].mxu0 %v59
    %v162 = vpop.f32.mrb[0].mxu0
    %v163 = vadd.f32 0.0, %v162
    %v164 = vpop.f32.mrb[0].mxu0
    %165 = vdwg.mxu0
    %v166 = vld [vmem:[%s0] sm:$0x1]
    %v167 = vld [vmem:[%s0 + $0x1] sm:$0x1]
    %v168 = vld [vmem:[%s0 + $0x2] sm:$0x1]
    %v169 = vld [vmem:[%s0 + $0x3] sm:$0x1]
    %v174 = vlaneseq
    %v175 = vshrl.u32 %v174, 7
    %v176 = vsub.s32 0, %v175
    %v177 = vrot.slane %v166, %v176
    %v178 = vlaneseq
    %v179 = vshrl.u32 %v178, 7
    %v180 = vsub.s32 0, %v179
    %v181 = vrot.slane %v167, %v180
    %v182 = vlaneseq
    %v183 = vshrl.u32 %v182, 7
    %v184 = vsub.s32 0, %v183
    %v185 = vrot.slane %v168, %v184
    %v186 = vlaneseq
    %v187 = vshrl.u32 %v186, 7
    %v188 = vsub.s32 0, %v187
    %v189 = vrot.slane %v169, %v188
    %v194 = vadd.f32 %v128, %v177
    %v195 = vadd.f32 %v133, %v177
    %v196 = vadd.f32 %v138, %v181
    %v197 = vadd.f32 %v143, %v181
    %v198 = vadd.f32 %v148, %v185
    %v199 = vadd.f32 %v153, %v185
    %v200 = vadd.f32 %v158, %v189
    %v201 = vadd.f32 %v163, %v189
    %v202 = vtanh.pop %v194
    %v203 = vtanh.pop %v195
    %v204 = vtanh.pop %v196
    %v205 = vtanh.pop %v197
    %v206 = vtanh.pop %v198
    %v207 = vtanh.pop %v199
    %v208 = vtanh.pop %v200
    %v209 = vtanh.pop %v201
    %v210 = vld [vmem:[%s3] sm:$0xff]
    %v211 = vld [vmem:[%s3 + $0x8] sm:$0xff]
    %v212 = vld [vmem:[%s3 + $0x10] sm:$0xff]
    %v213 = vld [vmem:[%s3 + $0x18] sm:$0xff]
    %vm214 = vcmask 261120
    %v216 = vsel %vm214, %v202, 0
    %v219 = vsel %vm214, %v203, 0
    %v222 = vsel %vm214, %v204, 0
    %v225 = vsel %vm214, %v205, 0
    %v228 = vsel %vm214, %v206, 0
    %v231 = vsel %vm214, %v207, 0
    %v234 = vsel %vm214, %v208, 0
    %v237 = vsel %vm214, %v209, 0
    %239 = vmatprep.subr.mxu0 0.0
    %240 = vmatpush1.msra.mxu0 %v210
    %241 = vmatprep.subr.mxu0 0.0
    %242 = vmatpush1.msra.mxu0 %v211
    %243 = vmatprep.subr.mxu0 0.0
    %244 = vmatpush1.msra.mxu0 %v212
    %245 = vmatprep.subr.mxu0 0.0
    %246 = vmatpush1.msra.mxu0 %v213
    %247 = vmatprep.subr.mxu0 0.0
    %248 = vmatpush1.msra.mxu0 0.0
    %249 = vmatprep.subr.mxu0 0.0
    %250 = vmatpush1.msra.mxu0 0.0
    %251 = vmatprep.subr.mxu0 0.0
    %252 = vmatpush1.msra.mxu0 0.0
    %253 = vmatprep.subr.mxu0 0.0
    %254 = vmatpush1.msra.mxu0 0.0
    %255 = vmatprep.subr.mxu0 0.0
    %256 = vmatpush1.msra.mxu0 0.0
    %257 = vmatprep.subr.mxu0 0.0
    %258 = vmatpush1.msra.mxu0 0.0
    %259 = vmatprep.subr.mxu0 0.0
    %260 = vmatpush1.msra.mxu0 0.0
    %261 = vmatprep.subr.mxu0 0.0
    %262 = vmatpush1.msra.mxu0 0.0
    %263 = vmatprep.subr.mxu0 0.0
    %264 = vmatpush1.msra.mxu0 0.0
    %265 = vmatprep.subr.mxu0 0.0
    %266 = vmatpush1.msra.mxu0 0.0
    %267 = vmatprep.subr.mxu0 0.0
    %268 = vmatpush1.msra.mxu0 0.0
    %269 = vmatprep.subr.mxu0 0.0
    %270 = vmatpush1.msra.mxu0 0.0
    %271 = vmatprep.subr.mxu0 0.0
    %272 = vmatpush1.msra.mxu0 0.0
    %273 = vmatprep.subr.mxu0 0.0
    %274 = vmatpush1.msra.mxu0 0.0
    %275 = vmatprep.subr.mxu0 0.0
    %276 = vmatpush1.msra.mxu0 0.0
    %277 = vmatprep.subr.mxu0 0.0
    %278 = vmatpush1.msra.mxu0 0.0
    %279 = vmatprep.subr.mxu0 0.0
    %280 = vmatpush1.msra.mxu0 0.0
    %281 = vmatprep.subr.mxu0 0.0
    %282 = vmatpush1.msra.mxu0 0.0
    %283 = vmatprep.subr.mxu0 0.0
    %284 = vmatpush1.msra.mxu0 0.0
    %285 = vmatprep.subr.mxu0 0.0
    %286 = vmatpush1.msra.mxu0 0.0
    %287 = vmatprep.subr.mxu0 0.0
    %288 = vmatpush1.msra.mxu0 0.0
    %289 = vmatprep.subr.mxu0 0.0
    %290 = vmatpush1.msra.mxu0 0.0
    %291 = vmatprep.subr.mxu0 0.0
    %292 = vmatpush1.msra.mxu0 0.0
    %293 = vmatprep.subr.mxu0 0.0
    %294 = vmatpush1.msra.mxu0 0.0
    %295 = vmatprep.subr.mxu0 0.0
    %296 = vmatpush1.msra.mxu0 0.0
    %297 = vmatprep.subr.mxu0 0.0
    %298 = vmatpush1.msra.mxu0 0.0
    %299 = vmatprep.subr.mxu0 0.0
    %300 = vmatpush1.msra.mxu0 0.0
    %301 = vmatprep.subr.mxu0 0.0
    %302 = vmatpush1.msra.mxu0 0.0
    %303 = vmatprep.mubr.f32.mxu0 0.0
    %304 = vmatmul.mubr.f32.gmra.mrb[0].mxu0 %v216
    %v305 = vpop.f32.mrb[0].mxu0
    %v306 = vadd.f32 0.0, %v305
    %v307 = vpop.f32.mrb[0].mxu0
    %308 = vmatprep.mubr.f32.mxu0 0.0
    %309 = vmatmul.mubr.f32.gmra.mrb[0].mxu0 %v219
    %v310 = vpop.f32.mrb[0].mxu0
    %v311 = vadd.f32 0.0, %v310
    %v312 = vpop.f32.mrb[0].mxu0
    %313 = vmatprep.mubr.f32.mxu0 0.0
    %314 = vmatmul.mubr.f32.gmra.mrb[0].mxu0 %v222
    %v315 = vpop.f32.mrb[0].mxu0
    %v316 = vadd.f32 0.0, %v315
    %v317 = vpop.f32.mrb[0].mxu0
    %318 = vmatprep.mubr.f32.mxu0 0.0
    %319 = vmatmul.mubr.f32.gmra.mrb[0].mxu0 %v225
    %v320 = vpop.f32.mrb[0].mxu0
    %v321 = vadd.f32 0.0, %v320
    %v322 = vpop.f32.mrb[0].mxu0
    %323 = vmatprep.mubr.f32.mxu0 0.0
    %324 = vmatmul.mubr.f32.gmra.mrb[0].mxu0 %v228
    %v325 = vpop.f32.mrb[0].mxu0
    %v326 = vadd.f32 0.0, %v325
    %v327 = vpop.f32.mrb[0].mxu0
    %328 = vmatprep.mubr.f32.mxu0 0.0
    %329 = vmatmul.mubr.f32.gmra.mrb[0].mxu0 %v231
    %v330 = vpop.f32.mrb[0].mxu0
    %v331 = vadd.f32 0.0, %v330
    %v332 = vpop.f32.mrb[0].mxu0
    %333 = vmatprep.mubr.f32.mxu0 0.0
    %334 = vmatmul.mubr.f32.gmra.mrb[0].mxu0 %v234
    %v335 = vpop.f32.mrb[0].mxu0
    %v336 = vadd.f32 0.0, %v335
    %v337 = vpop.f32.mrb[0].mxu0
    %338 = vmatprep.mubr.f32.mxu0 0.0
    %339 = vmatmul.mubr.f32.gmra.mrb[0].mxu0 %v237
    %v340 = vpop.f32.mrb[0].mxu0
    %v341 = vadd.f32 0.0, %v340
    %v342 = vpop.f32.mrb[0].mxu0
    %343 = vdwg.mxu0
    %vm344 = vcmask 7168
    %v345 = vsel %vm344, %v306, -inf
    %v346 = vsel %vm344, %v311, -inf
    %v347 = vmax.f32 %v345, %v346
    %v348 = vrot.slane %v347, 4
    %v349 = vmax.f32 %v347, %v348
    %v350 = vrot.slane %v349, 2
    %v351 = vmax.f32 %v349, %v350
    %v352 = vrot.slane %v351, 1
    %v353 = vmax.f32 %v351, %v352
    %v354 = vsel %vm344, %v316, -inf
    %v355 = vsel %vm344, %v321, -inf
    %v356 = vmax.f32 %v354, %v355
    %v357 = vrot.slane %v356, 4
    %v358 = vmax.f32 %v356, %v357
    %v359 = vrot.slane %v358, 2
    %v360 = vmax.f32 %v358, %v359
    %v361 = vrot.slane %v360, 1
    %v362 = vmax.f32 %v360, %v361
    %v363 = vsel %vm344, %v326, -inf
    %v364 = vsel %vm344, %v331, -inf
    %v365 = vmax.f32 %v363, %v364
    %v366 = vrot.slane %v365, 4
    %v367 = vmax.f32 %v365, %v366
    %v368 = vrot.slane %v367, 2
    %v369 = vmax.f32 %v367, %v368
    %v370 = vrot.slane %v369, 1
    %v371 = vmax.f32 %v369, %v370
    %v372 = vsel %vm344, %v336, -inf
    %v373 = vsel %vm344, %v341, -inf
    %v374 = vmax.f32 %v372, %v373
    %v375 = vrot.slane %v374, 4
    %v376 = vmax.f32 %v374, %v375
    %v377 = vrot.slane %v376, 2
    %v378 = vmax.f32 %v376, %v377
    %v379 = vrot.slane %v378, 1
    %v380 = vmax.f32 %v378, %v379
    %v381 = vsub.f32 %v306, %v353
    %v382 = vsub.f32 %v311, %v353
    %v383 = vsub.f32 %v316, %v362
    %v384 = vsub.f32 %v321, %v362
    %v385 = vsub.f32 %v326, %v371
    %v386 = vsub.f32 %v331, %v371
    %v387 = vsub.f32 %v336, %v380
    %v388 = vsub.f32 %v341, %v380
    %v389 = vmul.f32 %v381, 1.442695
    %v390 = vpow.pop %v389
    %v391 = vmul.f32 %v382, 1.442695
    %v392 = vpow.pop %v391
    %v393 = vmul.f32 %v383, 1.442695
    %v394 = vpow.pop %v393
    %v395 = vmul.f32 %v384, 1.442695
    %v396 = vpow.pop %v395
    %v397 = vmul.f32 %v385, 1.442695
    %v398 = vpow.pop %v397
    %v399 = vmul.f32 %v386, 1.442695
    %v400 = vpow.pop %v399
    %v401 = vmul.f32 %v387, 1.442695
    %v402 = vpow.pop %v401
    %v403 = vmul.f32 %v388, 1.442695
    %v404 = vpow.pop %v403
    %v405 = vsel %vm344, %v390, 0.0
    %v406 = vsel %vm344, %v392, 0.0
    %v407 = vadd.f32 %v405, %v406
    %v408 = vrot.slane %v407, 4
    %v409 = vadd.f32 %v407, %v408
    %v410 = vrot.slane %v409, 2
    %v411 = vadd.f32 %v409, %v410
    %v412 = vrot.slane %v411, 1
    %v413 = vadd.f32 %v411, %v412
    %v414 = vsel %vm344, %v394, 0.0
    %v415 = vsel %vm344, %v396, 0.0
    %v416 = vadd.f32 %v414, %v415
    %v417 = vrot.slane %v416, 4
    %v418 = vadd.f32 %v416, %v417
    %v419 = vrot.slane %v418, 2
    %v420 = vadd.f32 %v418, %v419
    %v421 = vrot.slane %v420, 1
    %v422 = vadd.f32 %v420, %v421
    %v423 = vsel %vm344, %v398, 0.0
    %v424 = vsel %vm344, %v400, 0.0
    %v425 = vadd.f32 %v423, %v424
    %v426 = vrot.slane %v425, 4
    %v427 = vadd.f32 %v425, %v426
    %v428 = vrot.slane %v427, 2
    %v429 = vadd.f32 %v427, %v428
    %v430 = vrot.slane %v429, 1
    %v431 = vadd.f32 %v429, %v430
    %v432 = vsel %vm344, %v402, 0.0
    %v433 = vsel %vm344, %v404, 0.0
    %v434 = vadd.f32 %v432, %v433
    %v435 = vrot.slane %v434, 4
    %v436 = vadd.f32 %v434, %v435
    %v437 = vrot.slane %v436, 2
    %v438 = vadd.f32 %v436, %v437
    %v439 = vrot.slane %v438, 1
    %v440 = vadd.f32 %v438, %v439
    %v441 = vrcp.pop %v413
    %v442 = vrcp.pop %v422
    %v443 = vrcp.pop %v431
    %v444 = vrcp.pop %v440
    %v445 = vmul.f32 %v390, %v441
    %v446 = vmul.f32 %v392, %v441
    %v447 = vmul.f32 %v394, %v442
    %v448 = vmul.f32 %v396, %v442
    %v449 = vmul.f32 %v398, %v443
    %v450 = vmul.f32 %v400, %v443
    %v451 = vmul.f32 %v402, %v444
    %v452 = vmul.f32 %v404, %v444
    %453 = vst.msk [vmem:[%s5] sm:$0xff] %vm344, %v445
    %454 = vst.msk [vmem:[%s5 + $0x8] sm:$0xff] %vm344, %v446
    %455 = vst.msk [vmem:[%s5 + $0x10] sm:$0xff] %vm344, %v447
    %456 = vst.msk [vmem:[%s5 + $0x18] sm:$0xff] %vm344, %v448
    %457 = vst.msk [vmem:[%s5 + $0x20] sm:$0xff] %vm344, %v449
    %458 = vst.msk [vmem:[%s5 + $0x28] sm:$0xff] %vm344, %v450
    %459 = vst.msk [vmem:[%s5 + $0x30] sm:$0xff] %vm344, %v451
    %460 = vst.msk [vmem:[%s5 + $0x38] sm:$0xff] %vm344, %v452
    %462 = vset.pattern.permute.xlu0 0
    %463 = vperm.xlu0 %462, %v445
    %v464 = vpop.permute.xlu0 %463
    %467 = vset.pattern.permute.xlu0 0
    %468 = vperm.xlu0 %467, %v446
    %v469 = vpop.permute.xlu0 %468
    %472 = vset.pattern.permute.xlu0 0
    %473 = vperm.xlu0 %472, %v447
    %v474 = vpop.permute.xlu0 %473
    %477 = vset.pattern.permute.xlu0 0
    %478 = vperm.xlu0 %477, %v448
    %v479 = vpop.permute.xlu0 %478
    %482 = vset.pattern.permute.xlu0 0
    %483 = vperm.xlu0 %482, %v449
    %v484 = vpop.permute.xlu0 %483
    %487 = vset.pattern.permute.xlu0 0
    %488 = vperm.xlu0 %487, %v450
    %v489 = vpop.permute.xlu0 %488
    %492 = vset.pattern.permute.xlu0 0
    %493 = vperm.xlu0 %492, %v451
    %v494 = vpop.permute.xlu0 %493
    %497 = vset.pattern.permute.xlu0 0
    %498 = vperm.xlu0 %497, %v452
    %v499 = vpop.permute.xlu0 %498
    %v501 = vmul.f32 %v20, %v464
    %v502 = vmul.f32 %v21, %v469
    %v503 = vmul.f32 %v22, %v474
    %v504 = vmul.f32 %v23, %v479
    %v505 = vmul.f32 %v24, %v484
    %v506 = vmul.f32 %v25, %v489
    %v507 = vmul.f32 %v26, %v494
    %v508 = vmul.f32 %v27, %v499
    %v509 = vsel %vm36, %v501, 0.0
    %v510 = vsel %vm36, %v502, 0.0
    %v511 = vadd.f32 %v509, %v510
    %v512 = vrot.slane %v511, 4
    %v513 = vadd.f32 %v511, %v512
    %v514 = vrot.slane %v513, 2
    %v515 = vadd.f32 %v513, %v514
    %v516 = vrot.slane %v515, 1
    %v517 = vadd.f32 %v515, %v516
    %v518 = vsel %vm36, %v503, 0.0
    %v519 = vsel %vm36, %v504, 0.0
    %v520 = vadd.f32 %v518, %v519
    %v521 = vrot.slane %v520, 4
    %v522 = vadd.f32 %v520, %v521
    %v523 = vrot.slane %v522, 2
    %v524 = vadd.f32 %v522, %v523
    %v525 = vrot.slane %v524, 1
    %v526 = vadd.f32 %v524, %v525
    %v527 = vsel %vm36, %v505, 0.0
    %v528 = vsel %vm36, %v506, 0.0
    %v529 = vadd.f32 %v527, %v528
    %v530 = vrot.slane %v529, 4
    %v531 = vadd.f32 %v529, %v530
    %v532 = vrot.slane %v531, 2
    %v533 = vadd.f32 %v531, %v532
    %v534 = vrot.slane %v533, 1
    %v535 = vadd.f32 %v533, %v534
    %v536 = vsel %vm36, %v507, 0.0
    %v537 = vsel %vm36, %v508, 0.0
    %v538 = vadd.f32 %v536, %v537
    %v539 = vrot.slane %v538, 4
    %v540 = vadd.f32 %v538, %v539
    %v541 = vrot.slane %v540, 2
    %v542 = vadd.f32 %v540, %v541
    %v543 = vrot.slane %v542, 1
    %v544 = vadd.f32 %v542, %v543
    %vm549 = vcmask 1041409
    %v550 = vsel %vm549, %v526, %v517
    %vm551 = vcmask 1042434
    %v552 = vsel %vm551, %v535, %v550
    %vm553 = vcmask 1043459
    %v554 = vsel %vm553, %v544, %v552
    %vm556 = vcmask 519168
    %557 = vst.msk [vmem:[#allocation2] sm:$0xf] %vm556, %v554
    // Predicated region
    $region18: #{tpu_custom_call.1} parent=1 // pred_check
      _
    $region19: #{tpu_custom_call.1} parent=1 // pred_check_branch
      %559 = sbr.rel (0) target = $region21
    $region20: #{tpu_custom_call.1} parent=1 // pred_region
      %s561 = ssub.s32 64, 64
      %562 = vsyncadd [#allocation3], %s561
      %s564 = sshll.u32 [#allocation2], 4
      %s565 = int_to_ptr.vmem [resolvable:$true] %s564
      %567 = dma.vmem_to_hbm [thread:$0]  %s565, 64, %s4, [#allocation3]
    $region21: #{tpu_custom_call.1} parent=1 // pred_fallthru
      _
    // Predicated region
    $region22: #{tpu_custom_call.1} parent=1 // pred_check
      _
    $region23: #{tpu_custom_call.1} parent=1 // pred_check_branch
      %569 = sbr.rel (0) target = $region25
    $region24: #{tpu_custom_call.1} parent=1 // pred_region
      _
    $region25: #{tpu_custom_call.1} parent=1 // pred_fallthru
      _
    // Predicated region
    $region26: #{tpu_custom_call.1} parent=1 // pred_check
      _
    $region27: #{tpu_custom_call.1} parent=1 // pred_check_branch
      %571 = sbr.rel (0) target = $region29
    $region28: #{tpu_custom_call.1} parent=1 // pred_region
      %572 = dma.done [#allocation3], 64
    $region29: #{tpu_custom_call.1} parent=1 // pred_fallthru
      _
    // Predicated region
    $region30: #{tpu_custom_call.1} parent=1 // pred_check
      _
    $region31: #{tpu_custom_call.1} parent=1 // pred_check_branch
      %574 = sbr.rel (0) target = $region33
    $region32: #{tpu_custom_call.1} parent=1 // pred_region
      _
    $region33: #{tpu_custom_call.1} parent=1 // pred_fallthru
      _
    %575 = vsyncpa [#allocation3], 1

</llo_original>
